<compile_context>
chip_gen: v7x
topology: tpu7x:2x2x1
jax: 0.10.0
libtpu: 0.0.40
codegen_flags: <defaults>
</compile_context>

<pallas_src>
import jax
import jax.numpy as jnp
from jax.experimental import pallas as pl
from jax.experimental.pallas import tpu as pltpu


def _round_up(x, m):
    return ((x + m - 1) // m) * m


# ---------------------------------------------------------------------------
# Kernel: batch-on-lanes fused MLP
# ---------------------------------------------------------------------------
def _mlp_kernel(x_ref, w1_ref, b1_ref, w2_ref, b2_ref, w3_ref, b3_ref, o_ref):
    # x_ref: (input_dim, tile_n) bf16   (batch along lanes -> lane-dense)
    # wK_ref: (out_features, in_features) bf16, bK_ref: (out_features, 1) f32
    x = x_ref[...]
    h1 = jnp.dot(w1_ref[...], x, preferred_element_type=jnp.float32) + b1_ref[...]
    h1 = jnp.maximum(h1, 0.0).astype(jnp.bfloat16)          # ReLU in f32, bf16 MXU feed
    h2 = jnp.dot(w2_ref[...], h1, preferred_element_type=jnp.float32) + b2_ref[...]
    h2 = jnp.maximum(h2, 0.0).astype(jnp.bfloat16)
    out = jnp.dot(w3_ref[...], h2, preferred_element_type=jnp.float32) + b3_ref[...]
    o_ref[...] = out.astype(o_ref.dtype)                     # (out_dim, tile_n), lane-dense


# ---------------------------------------------------------------------------
# VMEM accounting with real (sublane, 128-lane) padding
# ---------------------------------------------------------------------------
def _pad_bytes(rows, cols, itemsize):
    """Bytes a (rows, cols) block really occupies in VMEM: sublanes pad to the
    native tile (8 for 32-bit, 16 for 16-bit dtypes) and lanes pad to 128."""
    sub = 8 * (4 // itemsize)
    return _round_up(rows, sub) * _round_up(cols, 128) * itemsize


def _tile_vmem_bytes(tile_n, input_dim, h1_dim, h2_dim, out_dim):
    """Per-grid-step VMEM: double-buffered pipelined operands + compiler scratch
    holding the f32 and bf16 copies of the intermediates."""
    x_blk = 2 * _pad_bytes(input_dim, tile_n, 2)        # bf16 input block, double-buffered
    o_blk = 2 * _pad_bytes(out_dim, tile_n, 4)          # f32 output block, double-buffered
    scratch = (_pad_bytes(h1_dim, tile_n, 4) + _pad_bytes(h1_dim, tile_n, 2)
               + _pad_bytes(h2_dim, tile_n, 4) + _pad_bytes(h2_dim, tile_n, 2)
               + _pad_bytes(out_dim, tile_n, 4))
    return x_blk + o_blk + scratch


def _const_vmem_bytes(input_dim, h1_dim, h2_dim, out_dim):
    return (_pad_bytes(h1_dim, input_dim, 2) + _pad_bytes(h1_dim, 1, 4)
            + _pad_bytes(h2_dim, h1_dim, 2) + _pad_bytes(h2_dim, 1, 4)
            + _pad_bytes(out_dim, h2_dim, 2) + _pad_bytes(out_dim, 1, 4))


_MAX_TILE = 8192     # lanes per grid step; amortizes ~0.35us/step grid overhead
_MIN_SPLIT = 512     # never split the batch below this many columns per step
_VMEM_BUDGET = 24 * 1024 * 1024   # conservative vs v7x 32 MiB scoped / 64 MiB physical


def _choose_tile_n(n, dims, n_cores):
    tile = min(n, _MAX_TILE)
    # Split only when it buys TensorCore parallelism (2-TC chips) with enough
    # work per step; 1-TC chips (v5e/v6e) keep a single step for small batches.
    if n_cores >= 2 and n >= n_cores * _MIN_SPLIT:
        tile = min(tile, _round_up(pl.cdiv(n, n_cores), 128))
    if tile < n:
        tile = max(128, (tile // 128) * 128)             # lane-aligned partial grid
    while tile > 128 and _tile_vmem_bytes(tile, *dims) > _VMEM_BUDGET:
        tile = max(128, ((tile // 2) // 128) * 128)
    return int(tile)


def _tensorcores_per_device():
    """2 on v7x (megacore), 1 on v5e/v6e. Purely advisory; safe fallbacks."""
    try:
        dev = jax.devices()[0]
        nc = getattr(dev, "num_cores", None)
        if nc is not None and int(nc) >= 2:
            return 2
        if "v7" in str(getattr(dev, "device_kind", "")).lower():
            return 2
    except Exception:
        pass
    return 1


# ---------------------------------------------------------------------------
# Wrapper
# ---------------------------------------------------------------------------
@jax.jit
def mlp_forward(x, params):
    """Fused MLP forward. x: (N, input_dim) f32 (or bf16). Returns (N, out_dim) f32."""
    w1, b1, w2, b2, w3, b3 = params          # w: (out, in), b: (out, 1)  (PyTorch layout)
    n, input_dim = x.shape
    h1_dim, h2_dim, out_dim = w1.shape[0], w2.shape[0], w3.shape[0]
    dims = (input_dim, h1_dim, h2_dim, out_dim)

    n_cores = _tensorcores_per_device()
    tile_n = _choose_tile_n(n, dims, n_cores)
    grid_n = pl.cdiv(n, tile_n)

    # One fused XLA pass over x: transpose to batch-on-lanes AND cast to bf16.
    # No padding pass: a ragged tail is handled by the partial last grid block.
    xt = x.T.astype(jnp.bfloat16)                         # (input_dim, n)
    w1b, w2b, w3b = (w.astype(jnp.bfloat16) for w in (w1, w2, w3))
    b1f, b2f, b3f = (b.astype(jnp.float32) for b in (b1, b2, b3))

    if grid_n > 1 and n_cores >= 2 and grid_n % n_cores == 0:
        dim_sem = (pltpu.CORE_PARALLEL,)   # actually shard the batch over v7x TCs
    else:
        dim_sem = ("arbitrary",)           # single TC / single step: nothing to shard

    tile_bytes = _tile_vmem_bytes(tile_n, *dims)
    const_bytes = _const_vmem_bytes(*dims)
    vmem_limit = int(min(32 << 20,
                         max(8 << 20, 2 * tile_bytes + 2 * const_bytes + (2 << 20))))

    full = lambda i: (0, 0)   # weights / biases: single VMEM-resident block, fetched once

    out_t = pl.pallas_call(
        _mlp_kernel,
        out_shape=jax.ShapeDtypeStruct((out_dim, n), jnp.float32),
        grid_spec=pltpu.PrefetchScalarGridSpec(
            num_scalar_prefetch=0,
            grid=(grid_n,),
            in_specs=[
                pl.BlockSpec((input_dim, tile_n), lambda i: (0, i)),
                pl.BlockSpec((h1_dim, input_dim), full),
                pl.BlockSpec((h1_dim, 1), full),
                pl.BlockSpec((h2_dim, h1_dim), full),
                pl.BlockSpec((h2_dim, 1), full),
                pl.BlockSpec((out_dim, h2_dim), full),
                pl.BlockSpec((out_dim, 1), full),
            ],
            out_specs=pl.BlockSpec((out_dim, tile_n), lambda i: (0, i)),
        ),
        compiler_params=pltpu.CompilerParams(
            dimension_semantics=dim_sem,
            vmem_limit_bytes=vmem_limit,
        ),
    )(xt, w1b, b1f, w2b, b2f, w3b, b3f)

    return out_t.T                                        # (n, out_dim)


# ---------------------------------------------------------------------------
# Params / reference
# ---------------------------------------------------------------------------
def init_mlp_params(key, input_dim, output_dim):
    """PyTorch nn.Linear default init: U(-1/sqrt(fan_in), 1/sqrt(fan_in)) for
    weight and bias. Weights stored (out_features, in_features), biases (out, 1)."""
    dims = [(input_dim, 20), (20, 10), (10, output_dim)]
    params = []
    for fan_in, fan_out in dims:
        key, kw, kb = jax.random.split(key, 3)
        bound = 1.0 / jnp.sqrt(fan_in)
        w = jax.random.uniform(kw, (fan_out, fan_in), jnp.float32, -bound, bound)
        b = jax.random.uniform(kb, (fan_out, 1), jnp.float32, -bound, bound)
        params += [w, b]
    return tuple(params)


def mlp_reference(x, params):
    """f32 reference applying the same bf16 rounding as the kernel's MXU feeds."""
    w1, b1, w2, b2, w3, b3 = params
    bf = lambda a: a.astype(jnp.bfloat16).astype(jnp.float32)
    h1 = jnp.maximum(bf(x) @ bf(w1).T + b1.T, 0.0)
    h2 = jnp.maximum(bf(h1) @ bf(w2).T + b2.T, 0.0)
    return bf(h2) @ bf(w3).T + b3.T


if __name__ == "__main__":
    key = jax.random.PRNGKey(0)
    key, kx = jax.random.split(key)

    input_dim = 16
    output_dim = 4
    n = 64  # batch of node features (data.x); single grid step at this size

    x = jax.random.normal(kx, (n, input_dim), dtype=jnp.float32)
    params = init_mlp_params(key, input_dim, output_dim)

    out = jax.block_until_ready(mlp_forward(x, params))
    ref = mlp_reference(x, params)

    assert out.shape == (n, output_dim), out.shape
    assert jnp.allclose(out, ref, atol=1e-3, rtol=1e-3), "mismatch vs reference"

    print("KERNEL_OK")
</pallas_src>

<mosaic_0001>
module attributes {stable_mosaic.version = 11 : i64} {
  func.func @_mlp_kernel(%arg0: i32, %arg1: memref<16x64xbf16, #tpu.memory_space<vmem>>, %arg2: memref<20x16xbf16, #tpu.memory_space<vmem>>, %arg3: memref<20x1xf32, #tpu.memory_space<vmem>>, %arg4: memref<10x20xbf16, #tpu.memory_space<vmem>>, %arg5: memref<10x1xf32, #tpu.memory_space<vmem>>, %arg6: memref<4x10xbf16, #tpu.memory_space<vmem>>, %arg7: memref<4x1xf32, #tpu.memory_space<vmem>>, %arg8: memref<4x64xf32, #tpu.memory_space<vmem>>) attributes {dimension_semantics = [#tpu.dimension_semantics<arbitrary>], iteration_bounds = array<i64: 1>, scalar_prefetch = 0 : i64, scratch_operands = 0 : i64, tpu.core_type = #tpu.core_type<tc>, window_params = [{transform_indices = @transform_0, window_bounds = array<i64: 16, 64>}, {pipeline_mode = #tpu.pipeline_mode<synchronous>, transform_indices = @transform_1, window_bounds = array<i64: 20, 16>}, {pipeline_mode = #tpu.pipeline_mode<synchronous>, transform_indices = @transform_2, window_bounds = array<i64: 20, 1>}, {pipeline_mode = #tpu.pipeline_mode<synchronous>, transform_indices = @transform_3, window_bounds = array<i64: 10, 20>}, {pipeline_mode = #tpu.pipeline_mode<synchronous>, transform_indices = @transform_4, window_bounds = array<i64: 10, 1>}, {pipeline_mode = #tpu.pipeline_mode<synchronous>, transform_indices = @transform_5, window_bounds = array<i64: 4, 10>}, {pipeline_mode = #tpu.pipeline_mode<synchronous>, transform_indices = @transform_6, window_bounds = array<i64: 4, 1>}, {transform_indices = @transform_7, window_bounds = array<i64: 4, 64>}]} {
    %c0 = arith.constant 0 : index
    %c0_0 = arith.constant 0 : index
    %0 = vector.load %arg1[%c0, %c0_0] : memref<16x64xbf16, #tpu.memory_space<vmem>>, vector<16x64xbf16>
    %c0_1 = arith.constant 0 : index
    %c0_2 = arith.constant 0 : index
    %1 = vector.load %arg2[%c0_1, %c0_2] : memref<20x16xbf16, #tpu.memory_space<vmem>>, vector<20x16xbf16>
    %cst = arith.constant dense<0.000000e+00> : vector<20x64xf32>
    %2 = tpu.matmul %1, %0, %cst {dimension_numbers = #tpu.dot_dimension_numbers<[1], [0], [0], [1], [0, 0, 1, 1], [], []>} : vector<20x16xbf16>, vector<16x64xbf16>, vector<20x64xf32> -> vector<20x64xf32>
    %c0_3 = arith.constant 0 : index
    %c0_4 = arith.constant 0 : index
    %3 = vector.load %arg3[%c0_3, %c0_4] : memref<20x1xf32, #tpu.memory_space<vmem>>, vector<20x1xf32>
    %4 = vector.broadcast %3 : vector<20x1xf32> to vector<20x64xf32>
    %5 = arith.addf %2, %4 : vector<20x64xf32>
    %cst_5 = arith.constant 0.000000e+00 : f32
    %6 = vector.broadcast %cst_5 : f32 to vector<20x64xf32>
    %7 = arith.maximumf %5, %6 : vector<20x64xf32>
    %8 = arith.truncf %7 : vector<20x64xf32> to vector<20x64xbf16>
    %c0_6 = arith.constant 0 : index
    %c0_7 = arith.constant 0 : index
    %9 = vector.load %arg4[%c0_6, %c0_7] : memref<10x20xbf16, #tpu.memory_space<vmem>>, vector<10x20xbf16>
    %cst_8 = arith.constant dense<0.000000e+00> : vector<10x64xf32>
    %10 = tpu.matmul %9, %8, %cst_8 {dimension_numbers = #tpu.dot_dimension_numbers<[1], [0], [0], [1], [0, 0, 1, 1], [], []>} : vector<10x20xbf16>, vector<20x64xbf16>, vector<10x64xf32> -> vector<10x64xf32>
    %c0_9 = arith.constant 0 : index
    %c0_10 = arith.constant 0 : index
    %11 = vector.load %arg5[%c0_9, %c0_10] : memref<10x1xf32, #tpu.memory_space<vmem>>, vector<10x1xf32>
    %12 = vector.broadcast %11 : vector<10x1xf32> to vector<10x64xf32>
    %13 = arith.addf %10, %12 : vector<10x64xf32>
    %cst_11 = arith.constant 0.000000e+00 : f32
    %14 = vector.broadcast %cst_11 : f32 to vector<10x64xf32>
    %15 = arith.maximumf %13, %14 : vector<10x64xf32>
    %16 = arith.truncf %15 : vector<10x64xf32> to vector<10x64xbf16>
    %c0_12 = arith.constant 0 : index
    %c0_13 = arith.constant 0 : index
    %17 = vector.load %arg6[%c0_12, %c0_13] : memref<4x10xbf16, #tpu.memory_space<vmem>>, vector<4x10xbf16>
    %cst_14 = arith.constant dense<0.000000e+00> : vector<4x64xf32>
    %18 = tpu.matmul %17, %16, %cst_14 {dimension_numbers = #tpu.dot_dimension_numbers<[1], [0], [0], [1], [0, 0, 1, 1], [], []>} : vector<4x10xbf16>, vector<10x64xbf16>, vector<4x64xf32> -> vector<4x64xf32>
    %c0_15 = arith.constant 0 : index
    %c0_16 = arith.constant 0 : index
    %19 = vector.load %arg7[%c0_15, %c0_16] : memref<4x1xf32, #tpu.memory_space<vmem>>, vector<4x1xf32>
    %20 = vector.broadcast %19 : vector<4x1xf32> to vector<4x64xf32>
    %21 = arith.addf %18, %20 : vector<4x64xf32>
    %c0_17 = arith.constant 0 : index
    %c0_18 = arith.constant 0 : index
    %22 = vector.load %arg8[%c0_17, %c0_18] : memref<4x64xf32, #tpu.memory_space<vmem>>, vector<4x64xf32>
    tpu.vector_store %arg8[%c0_17, %c0_18], %21 {strides = array<i32>} : memref<4x64xf32, #tpu.memory_space<vmem>>, vector<4x64xf32>,
    return
  }
  func.func @transform_0(%arg0: i32) -> (i32, i32) {
    %c0_i32 = arith.constant 0 : i32
    %c0_i32_0 = arith.constant 0 : i32
    return %c0_i32, %arg0 : i32, i32
  }
  func.func @transform_1(%arg0: i32) -> (i32, i32) {
    %c0_i32 = arith.constant 0 : i32
    %c0_i32_0 = arith.constant 0 : i32
    %c0_i32_1 = arith.constant 0 : i32
    return %c0_i32, %c0_i32_0 : i32, i32
  }
  func.func @transform_2(%arg0: i32) -> (i32, i32) {
    %c0_i32 = arith.constant 0 : i32
    %c0_i32_0 = arith.constant 0 : i32
    %c0_i32_1 = arith.constant 0 : i32
    return %c0_i32, %c0_i32_0 : i32, i32
  }
  func.func @transform_3(%arg0: i32) -> (i32, i32) {
    %c0_i32 = arith.constant 0 : i32
    %c0_i32_0 = arith.constant 0 : i32
    %c0_i32_1 = arith.constant 0 : i32
    return %c0_i32, %c0_i32_0 : i32, i32
  }
  func.func @transform_4(%arg0: i32) -> (i32, i32) {
    %c0_i32 = arith.constant 0 : i32
    %c0_i32_0 = arith.constant 0 : i32
    %c0_i32_1 = arith.constant 0 : i32
    return %c0_i32, %c0_i32_0 : i32, i32
  }
  func.func @transform_5(%arg0: i32) -> (i32, i32) {
    %c0_i32 = arith.constant 0 : i32
    %c0_i32_0 = arith.constant 0 : i32
    %c0_i32_1 = arith.constant 0 : i32
    return %c0_i32, %c0_i32_0 : i32, i32
  }
  func.func @transform_6(%arg0: i32) -> (i32, i32) {
    %c0_i32 = arith.constant 0 : i32
    %c0_i32_0 = arith.constant 0 : i32
    %c0_i32_1 = arith.constant 0 : i32
    return %c0_i32, %c0_i32_0 : i32, i32
  }
  func.func @transform_7(%arg0: i32) -> (i32, i32) {
    %c0_i32 = arith.constant 0 : i32
    %c0_i32_0 = arith.constant 0 : i32
    return %c0_i32, %arg0 : i32, i32
  }
}

</mosaic_0001>

<llo_original>
// kernel: mlp_forward.1
$region0: #{mlp_forward.1}
  #allocation0 [shape = 'u32[]', space=smem, size = 0x4, offset = 0x4, fixed_abs, tag = 'smem constant byte address 0x4 - core index']
  #allocation1 [shape = 'u32[144,128]{1,0:T(1,128)}', space=vmem, size = 0x12000, scoped, tag = 'internal scratch']
  %s0 = inlined_call_operand.vmem [shape: bf16[16,64], index: 0, kind: input, shape index: {}]
  %s1 = inlined_call_operand.vmem [shape: bf16[20,16], index: 1, kind: input, shape index: {}]
  %s2 = inlined_call_operand.vmem [shape: f32[20,1], index: 2, kind: input, shape index: {}]
  %s3 = inlined_call_operand.vmem [shape: bf16[10,20], index: 3, kind: input, shape index: {}]
  %s4 = inlined_call_operand.vmem [shape: f32[10,1], index: 4, kind: input, shape index: {}]
  %s5 = inlined_call_operand.vmem [shape: bf16[4,10], index: 5, kind: input, shape index: {}]
  %s6 = inlined_call_operand.vmem [shape: f32[4,1], index: 6, kind: input, shape index: {}]
  %s7 = inlined_call_operand.hbm [shape: f32[4,64], index: 7, kind: output, shape index: {}]
  %s8 = sld [smem:[#allocation0]]
  $region38: #{mlp_forward.1} parent=0
    _
  %s10 = ssub.s32 1, %s8
  %s11 = scalar_select 0, %s10, %s8
  $region1: #{mlp_forward.1} parent=0
    #allocation2 [shape = 'u8[2048]{0}', space=vmem, size = 0x800, scoped, tag = 'output window, operand 0, single buffered']
    #allocation3 [shape = 's32[1]{0}', space=sflag, size = 0x4, scoped, tag = 'scoped memory for mlp_forward.1']
    %12 = vsyncpa [#allocation3], 0
    // Predicated region
    $region2: #{mlp_forward.1} parent=1 // pred_check
      _
    $region3: #{mlp_forward.1} parent=1 // pred_check_branch
      %14 = sbr.rel (0) target = $region5
    $region4: #{mlp_forward.1} parent=1 // pred_region
      _
    $region5: #{mlp_forward.1} parent=1 // pred_fallthru
      _
    // Predicated region
    $region6: #{mlp_forward.1} parent=1 // pred_check
      _
    $region7: #{mlp_forward.1} parent=1 // pred_check_branch
      %16 = sbr.rel (0) target = $region9
    $region8: #{mlp_forward.1} parent=1 // pred_region
      _
    $region9: #{mlp_forward.1} parent=1 // pred_fallthru
      _
    // Predicated region
    $region10: #{mlp_forward.1} parent=1 // pred_check
      _
    $region11: #{mlp_forward.1} parent=1 // pred_check_branch
      %18 = sbr.rel (0) target = $region13
    $region12: #{mlp_forward.1} parent=1 // pred_region
      _
    $region13: #{mlp_forward.1} parent=1 // pred_fallthru
      _
    // Predicated region
    $region14: #{mlp_forward.1} parent=1 // pred_check
      _
    $region15: #{mlp_forward.1} parent=1 // pred_check_branch
      %20 = sbr.rel (0) target = $region17
    $region16: #{mlp_forward.1} parent=1 // pred_region
      _
    $region17: #{mlp_forward.1} parent=1 // pred_fallthru
      _
    // Predicated region
    $region18: #{mlp_forward.1} parent=1 // pred_check
      _
    $region19: #{mlp_forward.1} parent=1 // pred_check_branch
      %22 = sbr.rel (0) target = $region21
    $region20: #{mlp_forward.1} parent=1 // pred_region
      _
    $region21: #{mlp_forward.1} parent=1 // pred_fallthru
      _
    // Predicated region
    $region22: #{mlp_forward.1} parent=1 // pred_check
      _
    $region23: #{mlp_forward.1} parent=1 // pred_check_branch
      %24 = sbr.rel (0) target = $region25
    $region24: #{mlp_forward.1} parent=1 // pred_region
      _
    $region25: #{mlp_forward.1} parent=1 // pred_fallthru
      _
    // Predicated region
    $region26: #{mlp_forward.1} parent=1 // pred_check
      _
    $region27: #{mlp_forward.1} parent=1 // pred_check_branch
      %26 = sbr.rel (0) target = $region29
    $region28: #{mlp_forward.1} parent=1 // pred_region
      _
    $region29: #{mlp_forward.1} parent=1 // pred_fallthru
      _
    %v28 = vld [vmem:[%s0] sm:$0xf]
    %v29 = vld [vmem:[%s0 + $0x4] sm:$0xf]
    %v30 = vld [vmem:[%s1] sm:$0xf]
    %v31 = vld [vmem:[%s1 + $0x4] sm:$0xf]
    %v32 = vld [vmem:[%s1 + $0x8] sm:$0x3]
    %v33 = vld [vmem:[%s2] sm:$0xff]
    %v34 = vld [vmem:[%s2 + $0x8] sm:$0xff]
    %v35 = vld [vmem:[%s2 + $0x10] sm:$0xf]
    %37 = vset.pattern.permute.xlu0 0
    %38 = vperm.xlu0 %37, %v33
    %v39 = vpop.permute.xlu0 %38
    %42 = vset.pattern.permute.xlu0 0
    %43 = vperm.xlu0 %42, %v34
    %v44 = vpop.permute.xlu0 %43
    %47 = vset.pattern.permute.xlu0 0
    %48 = vperm.xlu0 %47, %v35
    %v49 = vpop.permute.xlu0 %48
    %v54 = vunpack.c.l.b16 %v30
    %v55 = vunpack.c.l.b16 %v31
    %v56 = vunpack.c.l.b16 %v32
    %v57 = vpack.c.b16 %v55, %v54
    %v58 = vpack.c.b16 %v56, %v56
    %v61 = vunpack.c.l.b16 %v28
    %v62 = vunpack.c.l.b16 %v29
    %v63 = vpack.c.b16 %v62, %v61
    %vm65 = vcmask 130048
    %v67 = vsel %vm65, %v57, 0
    %v70 = vsel %vm65, %v58, 0
    %72 = vmatprep.subr.bf16.mxu0 0
    %73 = vmatpush1.bf16.msra.mxu0 %v63
    %74 = vmatprep.subr.bf16.mxu0 0
    %75 = vmatpush1.bf16.msra.mxu0 0
    %76 = vmatprep.subr.bf16.mxu0 0
    %77 = vmatpush1.bf16.msra.mxu0 0
    %78 = vmatprep.subr.bf16.mxu0 0
    %79 = vmatpush1.bf16.msra.mxu0 0
    %80 = vmatprep.subr.bf16.mxu0 0
    %81 = vmatpush1.bf16.msra.mxu0 0
    %82 = vmatprep.subr.bf16.mxu0 0
    %83 = vmatpush1.bf16.msra.mxu0 0
    %84 = vmatprep.subr.bf16.mxu0 0
    %85 = vmatpush1.bf16.msra.mxu0 0
    %86 = vmatprep.subr.bf16.mxu0 0
    %87 = vmatpush1.bf16.msra.mxu0 0
    %88 = vmatprep.subr.bf16.mxu0 0
    %89 = vmatpush1.bf16.msra.mxu0 0
    %90 = vmatprep.subr.bf16.mxu0 0
    %91 = vmatpush1.bf16.msra.mxu0 0
    %92 = vmatprep.subr.bf16.mxu0 0
    %93 = vmatpush1.bf16.msra.mxu0 0
    %94 = vmatprep.subr.bf16.mxu0 0
    %95 = vmatpush1.bf16.msra.mxu0 0
    %96 = vmatprep.subr.bf16.mxu0 0
    %97 = vmatpush1.bf16.msra.mxu0 0
    %98 = vmatprep.subr.bf16.mxu0 0
    %99 = vmatpush1.bf16.msra.mxu0 0
    %100 = vmatprep.subr.bf16.mxu0 0
    %101 = vmatpush1.bf16.msra.mxu0 0
    %102 = vmatprep.subr.bf16.mxu0 0
    %103 = vmatpush1.bf16.msra.mxu0 0
    %104 = vmatprep.mubr.bf16.mxu0 0
    %105 = vmatmul.mubr.bf16.gmra.mrb[0].mxu0 %v67
    %v106 = vpop.f32.mrb[0].mxu0
    %v107 = vadd.f32 %v39, %v106
    %v108 = vpop.f32.mrb[0].mxu0
    %v109 = vpop.f32.mrb[0].mxu0
    %v110 = vadd.f32 %v44, %v109
    %v111 = vpop.f32.mrb[0].mxu0
    %112 = vmatprep.mubr.bf16.mxu0 0
    %113 = vmatmul.mubr.bf16.gmra.mrb[0].mxu0 %v70
    %v114 = vpop.f32.mrb[0].mxu0
    %v115 = vadd.f32 %v49, %v114
    %v116 = vpop.f32.mrb[0].mxu0
    %v117 = vpop.f32.mrb[0].mxu0
    %v118 = vpop.f32.mrb[0].mxu0
    %119 = vdwg.mxu0
    %v120 = vmax.f32 %v107, 0.0
    %v121 = vmax.f32 %v110, 0.0
    %v122 = vmax.f32 %v115, 0.0
    %v123 = vpack.c.bf16 %v121, %v120
    %v124 = vpack.c.bf16 %v122, %v122
    %v125 = vld [vmem:[%s3] sm:$0xf]
    %v126 = vld [vmem:[%s3 + $0x4] sm:$0x1]
    %v127 = vld [vmem:[%s4] sm:$0xff]
    %v128 = vld [vmem:[%s4 + $0x8] sm:$0x3]
    %130 = vset.pattern.permute.xlu0 0
    %131 = vperm.xlu0 %130, %v127
    %v132 = vpop.permute.xlu0 %131
    %135 = vset.pattern.permute.xlu0 0
    %136 = vperm.xlu0 %135, %v128
    %v137 = vpop.permute.xlu0 %136
    %v141 = vunpack.c.l.b16 %v125
    %v142 = vunpack.c.l.b16 %v126
    %v143 = vpack.c.b16 %v142, %v141
    %vm144 = vcmask 162816
    %v146 = vsel %vm144, %v143, 0
    %vm148 = vcmask 1041408
    %v150 = vsel %vm148, %v124, 0
    %152 = vmatprep.subr.bf16.mxu0 0
    %153 = vmatpush1.bf16.msra.mxu0 %v123
    %154 = vmatprep.subr.bf16.mxu0 0
    %155 = vmatpush1.bf16.msra.mxu0 %v150
    %156 = vmatprep.subr.bf16.mxu0 0
    %157 = vmatpush1.bf16.msra.mxu0 0
    %158 = vmatprep.subr.bf16.mxu0 0
    %159 = vmatpush1.bf16.msra.mxu0 0
    %160 = vmatprep.subr.bf16.mxu0 0
    %161 = vmatpush1.bf16.msra.mxu0 0
    %162 = vmatprep.subr.bf16.mxu0 0
    %163 = vmatpush1.bf16.msra.mxu0 0
    %164 = vmatprep.subr.bf16.mxu0 0
    %165 = vmatpush1.bf16.msra.mxu0 0
    %166 = vmatprep.subr.bf16.mxu0 0
    %167 = vmatpush1.bf16.msra.mxu0 0
    %168 = vmatprep.subr.bf16.mxu0 0
    %169 = vmatpush1.bf16.msra.mxu0 0
    %170 = vmatprep.subr.bf16.mxu0 0
    %171 = vmatpush1.bf16.msra.mxu0 0
    %172 = vmatprep.subr.bf16.mxu0 0
    %173 = vmatpush1.bf16.msra.mxu0 0
    %174 = vmatprep.subr.bf16.mxu0 0
    %175 = vmatpush1.bf16.msra.mxu0 0
    %176 = vmatprep.subr.bf16.mxu0 0
    %177 = vmatpush1.bf16.msra.mxu0 0
    %178 = vmatprep.subr.bf16.mxu0 0
    %179 = vmatpush1.bf16.msra.mxu0 0
    %180 = vmatprep.subr.bf16.mxu0 0
    %181 = vmatpush1.bf16.msra.mxu0 0
    %182 = vmatprep.subr.bf16.mxu0 0
    %183 = vmatpush1.bf16.msra.mxu0 0
    %184 = vmatprep.mubr.bf16.mxu0 0
    %185 = vmatmul.mubr.bf16.gmra.mrb[0].mxu0 %v146
    %v186 = vpop.f32.mrb[0].mxu0
    %v187 = vadd.f32 %v132, %v186
    %v188 = vpop.f32.mrb[0].mxu0
    %v189 = vpop.f32.mrb[0].mxu0
    %v190 = vadd.f32 %v137, %v189
    %v191 = vpop.f32.mrb[0].mxu0
    %192 = vdwg.mxu0
    %v193 = vmax.f32 %v187, 0.0
    %v194 = vmax.f32 %v190, 0.0
    %v195 = vpack.c.bf16 %v194, %v193
    %v196 = vld [vmem:[%s5] sm:$0x3]
    %v197 = vld [vmem:[%s6] sm:$0xf]
    %199 = vset.pattern.permute.xlu0 0
    %200 = vperm.xlu0 %199, %v197
    %v201 = vpop.permute.xlu0 %200
    %vm203 = vcmask 80896
    %v205 = vsel %vm203, %v196, 0
    %vm207 = vcmask 1044480
    %v209 = vsel %vm207, %v195, 0
    %211 = vmatprep.subr.bf16.mxu0 0
    %212 = vmatpush1.bf16.msra.mxu0 %v209
    %213 = vmatprep.subr.bf16.mxu0 0
    %214 = vmatpush1.bf16.msra.mxu0 0
    %215 = vmatprep.subr.bf16.mxu0 0
    %216 = vmatpush1.bf16.msra.mxu0 0
    %217 = vmatprep.subr.bf16.mxu0 0
    %218 = vmatpush1.bf16.msra.mxu0 0
    %219 = vmatprep.subr.bf16.mxu0 0
    %220 = vmatpush1.bf16.msra.mxu0 0
    %221 = vmatprep.subr.bf16.mxu0 0
    %222 = vmatpush1.bf16.msra.mxu0 0
    %223 = vmatprep.subr.bf16.mxu0 0
    %224 = vmatpush1.bf16.msra.mxu0 0
    %225 = vmatprep.subr.bf16.mxu0 0
    %226 = vmatpush1.bf16.msra.mxu0 0
    %227 = vmatprep.subr.bf16.mxu0 0
    %228 = vmatpush1.bf16.msra.mxu0 0
    %229 = vmatprep.subr.bf16.mxu0 0
    %230 = vmatpush1.bf16.msra.mxu0 0
    %231 = vmatprep.subr.bf16.mxu0 0
    %232 = vmatpush1.bf16.msra.mxu0 0
    %233 = vmatprep.subr.bf16.mxu0 0
    %234 = vmatpush1.bf16.msra.mxu0 0
    %235 = vmatprep.subr.bf16.mxu0 0
    %236 = vmatpush1.bf16.msra.mxu0 0
    %237 = vmatprep.subr.bf16.mxu0 0
    %238 = vmatpush1.bf16.msra.mxu0 0
    %239 = vmatprep.subr.bf16.mxu0 0
    %240 = vmatpush1.bf16.msra.mxu0 0
    %241 = vmatprep.subr.bf16.mxu0 0
    %242 = vmatpush1.bf16.msra.mxu0 0
    %243 = vmatprep.mubr.bf16.mxu0 0
    %244 = vmatmul.mubr.bf16.gmra.mrb[0].mxu0 %v205
    %v245 = vpop.f32.mrb[0].mxu0
    %v246 = vadd.f32 %v201, %v245
    %v247 = vpop.f32.mrb[0].mxu0
    %v248 = vpop.f32.mrb[0].mxu0
    %v249 = vpop.f32.mrb[0].mxu0
    %250 = vdwg.mxu0
    %vm251 = vcmask 519168
    %252 = vst.msk [vmem:[#allocation2] sm:$0xf] %vm251, %v246
    // Predicated region
    $region30: #{mlp_forward.1} parent=1 // pred_check
      _
    $region31: #{mlp_forward.1} parent=1 // pred_check_branch
      %254 = sbr.rel (0) target = $region33
    $region32: #{mlp_forward.1} parent=1 // pred_region
      %s256 = ssub.s32 64, 64
      %257 = vsyncadd [#allocation3], %s256
      %s259 = sshll.u32 [#allocation2], 4
      %s260 = int_to_ptr.vmem [resolvable:$true] %s259
      %262 = dma.vmem_to_hbm [thread:$0]  %s260, 64, %s7, [#allocation3]
    $region33: #{mlp_forward.1} parent=1 // pred_fallthru
      _
    // Predicated region
    $region34: #{mlp_forward.1} parent=1 // pred_check
      _
    $region35: #{mlp_forward.1} parent=1 // pred_check_branch
      %264 = sbr.rel (0) target = $region37
    $region36: #{mlp_forward.1} parent=1 // pred_region
      %265 = dma.done [#allocation3], 64
    $region37: #{mlp_forward.1} parent=1 // pred_fallthru
      _
    %266 = vsyncpa [#allocation3], 1

</llo_original>
